<compile_context>
chip_gen: v5e
topology: v5e:2x2
jax: 0.10.0
libtpu: 0.0.40
codegen_flags: <defaults>
</compile_context>

<pallas_src>
import math

import numpy as np
import jax
import jax.numpy as jnp
from jax.experimental import pallas as pl
from jax.experimental.pallas import tpu as pltpu


_WIN = 11          # window_size (module default)
_HALF = _WIN // 2  # 5
_SIGMA = 1.5


def _gauss_taps():
    """1-D gaussian taps, matching gaussian(11, 1.5) in the torch reference."""
    g = np.array(
        [math.exp(-((i - _WIN // 2) ** 2) / (2.0 * _SIGMA ** 2)) for i in range(_WIN)],
        dtype=np.float64)
    g = g / g.sum()
    return g.astype(np.float32)


def _band_matrix(n):
    """n x n banded gaussian-filter matrix (band truncated at the borders == zero pad).

    Vertical pass:   (Gv @ p)[i, :]  = sum_d g[d+5] * p[i+d, :]   (p zero outside [0, n))
    Horizontal pass: (p @ Gh)[:, k]  = sum_d g[d+5] * p[:, k+d]
    g is symmetric, so the same symmetric band matrix serves both passes.
    """
    g = _gauss_taps()
    m = np.zeros((n, n), dtype=np.float32)
    for i in range(n):
        lo = max(0, i - _HALF)
        hi = min(n, i + _HALF + 1)
        for j in range(lo, hi):
            m[i, j] = g[j - i + _HALF]
    return m


def _ssim_kernel(consts_ref, gv_ref, gh_ref, x_ref, y_ref, out_ref):
    c1 = consts_ref[0]
    c2 = consts_ref[1]

    # Native-dtype DMA; cast to f32 on-chip.
    x = x_ref[...].astype(jnp.float32)
    y = y_ref[...].astype(jnp.float32)
    gv = gv_ref[...]
    gh = gh_ref[...]

    def gfilt(p):
        # Separable 11x11 gaussian (zero padding encoded in the band matrices) on the MXU.
        v = jnp.dot(gv, p, preferred_element_type=jnp.float32)
        return jnp.dot(v, gh, preferred_element_type=jnp.float32)

    mu1 = gfilt(x)
    mu2 = gfilt(y)
    e11 = gfilt(x * x)
    e22 = gfilt(y * y)
    e12 = gfilt(x * y)

    mu1_sq = mu1 * mu1
    mu2_sq = mu2 * mu2
    mu12 = mu1 * mu2
    sigma1_sq = jnp.maximum(e11 - mu1_sq, 0.0)   # F.relu
    sigma2_sq = jnp.maximum(e22 - mu2_sq, 0.0)   # F.relu
    sigma12 = e12 - mu12

    # Exact division (not approx reciprocal) to stay bit-faithful to the torch reference.
    ssim_map = ((2.0 * mu12 + c1) * (2.0 * sigma12 + c2)) / (
        (mu1_sq + mu2_sq + c1) * (sigma1_sq + sigma2_sq + c2))

    out_ref[...] = jnp.sum(ssim_map, axis=(0, 1), keepdims=True)


def edge_ssim_loss(img1, img2, *, data_range=None):
    """EdgeSSIM.forward(img1, img2) with pts=None, weight=None (mode='ssim').

    img1, img2: (B, C, H, W) arrays (any float/integer dtype). Returns scalar
    ssim_map.mean(). Pass `data_range=` (e.g. 1.0 or 255.0) if the dynamic range is known
    statically to skip the extra HBM reduction over img1.
    """
    b, c, h, w = img1.shape
    assert img2.shape == img1.shape, "img1/img2 shape mismatch"

    # Banded gaussian matrices (static, tiny) — conv2d zero padding is baked in.
    gv = jnp.asarray(_band_matrix(h))
    gh = jnp.asarray(_band_matrix(w))

    # Data-range constants (same data-dependent rule as the torch module).
    if data_range is not None:
        lrange = float(data_range)
        consts = jnp.array([(0.01 * lrange) ** 2, (0.03 * lrange) ** 2], dtype=jnp.float32)
    else:
        max_val = jnp.where(jnp.max(img1).astype(jnp.float32) > 128.0, 255.0, 1.0)
        min_val = jnp.where(jnp.min(img1).astype(jnp.float32) < -0.5, -1.0, 0.0)
        lrange = max_val - min_val
        consts = jnp.stack([(0.01 * lrange) ** 2, (0.03 * lrange) ** 2]).astype(jnp.float32)

    # VMEM budget: double-buffered native-dtype image planes + resident Gv/Gh + f32 temps.
    in_itemsize = int(jnp.dtype(img1.dtype).itemsize)
    plane_f32 = h * w * 4
    est_bytes = (2 * 2 * h * w * in_itemsize       # img1/img2 planes, double-buffered
                 + 2 * (h * h + w * w) * 4         # Gv, Gh (+ pipeline buffer)
                 + 16 * plane_f32)                 # live f32 intermediates (generous)
    if est_bytes > 48 * 1024 * 1024:
        # TODO(synk): H-tiled variant (per-tile banded Gv + halo rows) for very large planes.
        raise NotImplementedError(
            "edge_ssim_loss: plane working set too large for single-plane kernel")
    vmem_limit = int(min(max(2 * est_bytes, 16 * 1024 * 1024), 64 * 1024 * 1024))

    img_spec = pl.BlockSpec((None, None, h, w), lambda bi, ci: (bi, ci, 0, 0))

    partial = pl.pallas_call(
        _ssim_kernel,
        out_shape=jax.ShapeDtypeStruct((b, c, 1, 1), jnp.float32),
        grid=(b, c),
        in_specs=[
            pl.BlockSpec(memory_space=pltpu.MemorySpace.SMEM),      # [C1, C2]
            pl.BlockSpec((h, h), lambda bi, ci: (0, 0)),            # Gv (VMEM-resident)
            pl.BlockSpec((w, w), lambda bi, ci: (0, 0)),            # Gh (VMEM-resident)
            img_spec,                                               # img1 plane
            img_spec,                                               # img2 plane
        ],
        out_specs=pl.BlockSpec((None, None, 1, 1), lambda bi, ci: (bi, ci, 0, 0)),
        compiler_params=pltpu.CompilerParams(
            dimension_semantics=("parallel", "parallel"),
            vmem_limit_bytes=vmem_limit),
    )(consts, gv, gh, img1, img2)

    return jnp.sum(partial) / float(b * c * h * w)


if __name__ == "__main__":
    key = jax.random.PRNGKey(0)
    k1, k2 = jax.random.split(key)

    B, C, H, W = 2, 3, 32, 32
    img1 = jax.random.uniform(k1, (B, C, H, W), dtype=jnp.float32)
    img2 = jnp.clip(
        img1 + 0.1 * jax.random.normal(k2, (B, C, H, W), dtype=jnp.float32), 0.0, 1.0)

    loss = edge_ssim_loss(img1, img2)   # dynamic data-range path (matches torch exactly)
    jax.block_until_ready(loss)
    assert bool(jnp.isfinite(loss)), "edge_ssim_loss produced a non-finite value"
    print("KERNEL_OK")
</pallas_src>

<mosaic_0001>
module attributes {stable_mosaic.version = 11 : i64} {
  func.func @_ssim_kernel(%arg0: i32, %arg1: i32, %arg2: memref<2xf32, #tpu.memory_space<smem>>, %arg3: memref<32x32xf32, #tpu.memory_space<vmem>>, %arg4: memref<32x32xf32, #tpu.memory_space<vmem>>, %arg5: memref<1x1x32x32xf32, #tpu.memory_space<vmem>>, %arg6: memref<1x1x32x32xf32, #tpu.memory_space<vmem>>, %arg7: memref<1x1x1x1xf32, #tpu.memory_space<vmem>>) attributes {dimension_semantics = [#tpu.dimension_semantics<parallel>, #tpu.dimension_semantics<parallel>], iteration_bounds = array<i64: 2, 3>, scalar_prefetch = 0 : i64, scratch_operands = 0 : i64, tpu.core_type = #tpu.core_type<tc>, window_params = [{transform_indices = @transform_0, window_bounds = array<i64: 2>}, {pipeline_mode = #tpu.pipeline_mode<synchronous>, transform_indices = @transform_1, window_bounds = array<i64: 32, 32>}, {pipeline_mode = #tpu.pipeline_mode<synchronous>, transform_indices = @transform_2, window_bounds = array<i64: 32, 32>}, {transform_indices = @transform_3, window_bounds = array<i64: 1, 1, 32, 32>}, {transform_indices = @transform_4, window_bounds = array<i64: 1, 1, 32, 32>}, {transform_indices = @transform_5, window_bounds = array<i64: 1, 1, 1, 1>}]} {
    %c0 = arith.constant 0 : index
    %0 = memref.load %arg2[%c0] : memref<2xf32, #tpu.memory_space<smem>>
    %c1 = arith.constant 1 : index
    %1 = memref.load %arg2[%c1] : memref<2xf32, #tpu.memory_space<smem>>
    %c0_0 = arith.constant 0 : index
    %c0_1 = arith.constant 0 : index
    %c0_2 = arith.constant 0 : index
    %c0_3 = arith.constant 0 : index
    %2 = vector.load %arg5[%c0_0, %c0_1, %c0_2, %c0_3] : memref<1x1x32x32xf32, #tpu.memory_space<vmem>>, vector<1x1x32x32xf32>
    %3 = vector.shape_cast %2 : vector<1x1x32x32xf32> to vector<32x32xf32>
    %c0_4 = arith.constant 0 : index
    %c0_5 = arith.constant 0 : index
    %c0_6 = arith.constant 0 : index
    %c0_7 = arith.constant 0 : index
    %4 = vector.load %arg6[%c0_4, %c0_5, %c0_6, %c0_7] : memref<1x1x32x32xf32, #tpu.memory_space<vmem>>, vector<1x1x32x32xf32>
    %5 = vector.shape_cast %4 : vector<1x1x32x32xf32> to vector<32x32xf32>
    %c0_8 = arith.constant 0 : index
    %c0_9 = arith.constant 0 : index
    %6 = vector.load %arg3[%c0_8, %c0_9] : memref<32x32xf32, #tpu.memory_space<vmem>>, vector<32x32xf32>
    %c0_10 = arith.constant 0 : index
    %c0_11 = arith.constant 0 : index
    %7 = vector.load %arg4[%c0_10, %c0_11] : memref<32x32xf32, #tpu.memory_space<vmem>>, vector<32x32xf32>
    %cst = arith.constant dense<0.000000e+00> : vector<32x32xf32>
    %8 = tpu.matmul %6, %3, %cst {dimension_numbers = #tpu.dot_dimension_numbers<[1], [0], [0], [1], [0, 0, 1, 1], [], []>} : vector<32x32xf32>, vector<32x32xf32>, vector<32x32xf32> -> vector<32x32xf32>
    %cst_12 = arith.constant dense<0.000000e+00> : vector<32x32xf32>
    %9 = tpu.matmul %8, %7, %cst_12 {dimension_numbers = #tpu.dot_dimension_numbers<[1], [0], [0], [1], [0, 0, 1, 1], [], []>} : vector<32x32xf32>, vector<32x32xf32>, vector<32x32xf32> -> vector<32x32xf32>
    %cst_13 = arith.constant dense<0.000000e+00> : vector<32x32xf32>
    %10 = tpu.matmul %6, %5, %cst_13 {dimension_numbers = #tpu.dot_dimension_numbers<[1], [0], [0], [1], [0, 0, 1, 1], [], []>} : vector<32x32xf32>, vector<32x32xf32>, vector<32x32xf32> -> vector<32x32xf32>
    %cst_14 = arith.constant dense<0.000000e+00> : vector<32x32xf32>
    %11 = tpu.matmul %10, %7, %cst_14 {dimension_numbers = #tpu.dot_dimension_numbers<[1], [0], [0], [1], [0, 0, 1, 1], [], []>} : vector<32x32xf32>, vector<32x32xf32>, vector<32x32xf32> -> vector<32x32xf32>
    %12 = arith.mulf %3, %3 : vector<32x32xf32>
    %cst_15 = arith.constant dense<0.000000e+00> : vector<32x32xf32>
    %13 = tpu.matmul %6, %12, %cst_15 {dimension_numbers = #tpu.dot_dimension_numbers<[1], [0], [0], [1], [0, 0, 1, 1], [], []>} : vector<32x32xf32>, vector<32x32xf32>, vector<32x32xf32> -> vector<32x32xf32>
    %cst_16 = arith.constant dense<0.000000e+00> : vector<32x32xf32>
    %14 = tpu.matmul %13, %7, %cst_16 {dimension_numbers = #tpu.dot_dimension_numbers<[1], [0], [0], [1], [0, 0, 1, 1], [], []>} : vector<32x32xf32>, vector<32x32xf32>, vector<32x32xf32> -> vector<32x32xf32>
    %15 = arith.mulf %5, %5 : vector<32x32xf32>
    %cst_17 = arith.constant dense<0.000000e+00> : vector<32x32xf32>
    %16 = tpu.matmul %6, %15, %cst_17 {dimension_numbers = #tpu.dot_dimension_numbers<[1], [0], [0], [1], [0, 0, 1, 1], [], []>} : vector<32x32xf32>, vector<32x32xf32>, vector<32x32xf32> -> vector<32x32xf32>
    %cst_18 = arith.constant dense<0.000000e+00> : vector<32x32xf32>
    %17 = tpu.matmul %16, %7, %cst_18 {dimension_numbers = #tpu.dot_dimension_numbers<[1], [0], [0], [1], [0, 0, 1, 1], [], []>} : vector<32x32xf32>, vector<32x32xf32>, vector<32x32xf32> -> vector<32x32xf32>
    %18 = arith.mulf %3, %5 : vector<32x32xf32>
    %cst_19 = arith.constant dense<0.000000e+00> : vector<32x32xf32>
    %19 = tpu.matmul %6, %18, %cst_19 {dimension_numbers = #tpu.dot_dimension_numbers<[1], [0], [0], [1], [0, 0, 1, 1], [], []>} : vector<32x32xf32>, vector<32x32xf32>, vector<32x32xf32> -> vector<32x32xf32>
    %cst_20 = arith.constant dense<0.000000e+00> : vector<32x32xf32>
    %20 = tpu.matmul %19, %7, %cst_20 {dimension_numbers = #tpu.dot_dimension_numbers<[1], [0], [0], [1], [0, 0, 1, 1], [], []>} : vector<32x32xf32>, vector<32x32xf32>, vector<32x32xf32> -> vector<32x32xf32>
    %21 = arith.mulf %9, %9 : vector<32x32xf32>
    %22 = arith.mulf %11, %11 : vector<32x32xf32>
    %23 = arith.mulf %9, %11 : vector<32x32xf32>
    %24 = arith.subf %14, %21 : vector<32x32xf32>
    %cst_21 = arith.constant 0.000000e+00 : f32
    %25 = vector.broadcast %cst_21 : f32 to vector<32x32xf32>
    %26 = arith.maximumf %24, %25 : vector<32x32xf32>
    %27 = arith.subf %17, %22 : vector<32x32xf32>
    %cst_22 = arith.constant 0.000000e+00 : f32
    %28 = vector.broadcast %cst_22 : f32 to vector<32x32xf32>
    %29 = arith.maximumf %27, %28 : vector<32x32xf32>
    %30 = arith.subf %20, %23 : vector<32x32xf32>
    %cst_23 = arith.constant 2.000000e+00 : f32
    %31 = vector.broadcast %cst_23 : f32 to vector<32x32xf32>
    %32 = arith.mulf %31, %23 : vector<32x32xf32>
    %33 = vector.broadcast %0 : f32 to vector<32x32xf32>
    %34 = arith.addf %32, %33 : vector<32x32xf32>
    %cst_24 = arith.constant 2.000000e+00 : f32
    %35 = vector.broadcast %cst_24 : f32 to vector<32x32xf32>
    %36 = arith.mulf %35, %30 : vector<32x32xf32>
    %37 = vector.broadcast %1 : f32 to vector<32x32xf32>
    %38 = arith.addf %36, %37 : vector<32x32xf32>
    %39 = arith.mulf %34, %38 : vector<32x32xf32>
    %40 = arith.addf %21, %22 : vector<32x32xf32>
    %41 = vector.broadcast %0 : f32 to vector<32x32xf32>
    %42 = arith.addf %40, %41 : vector<32x32xf32>
    %43 = arith.addf %26, %29 : vector<32x32xf32>
    %44 = vector.broadcast %1 : f32 to vector<32x32xf32>
    %45 = arith.addf %43, %44 : vector<32x32xf32>
    %46 = arith.mulf %42, %45 : vector<32x32xf32>
    %47 = arith.divf %39, %46 : vector<32x32xf32>
    %48 = vector.shape_cast %47 : vector<32x32xf32> to vector<1x32x32xf32>
    %cst_25 = arith.constant dense<0.000000e+00> : vector<1xf32>
    %49 = vector.multi_reduction <add>, %48, %cst_25 [1, 2] : vector<1x32x32xf32> to vector<1xf32>
    %50 = vector.shape_cast %49 : vector<1xf32> to vector<1x1x1xf32>
    %51 = vector.extract %50[0, 0, 0] : f32 from vector<1x1x1xf32>
    %52 = vector.broadcast %51 : f32 to vector<1x1xf32>
    %c0_26 = arith.constant 0 : index
    %c0_27 = arith.constant 0 : index
    %c0_28 = arith.constant 0 : index
    %c0_29 = arith.constant 0 : index
    %53 = vector.load %arg7[%c0_26, %c0_27, %c0_28, %c0_29] : memref<1x1x1x1xf32, #tpu.memory_space<vmem>>, vector<1x1x1x1xf32>
    %54 = vector.shape_cast %53 : vector<1x1x1x1xf32> to vector<1x1xf32>
    %55 = vector.shape_cast %52 : vector<1x1xf32> to vector<1x1x1x1xf32>
    tpu.vector_store %arg7[%c0_26, %c0_27, %c0_28, %c0_29], %55 {strides = array<i32>} : memref<1x1x1x1xf32, #tpu.memory_space<vmem>>, vector<1x1x1x1xf32>,
    return
  }
  func.func @transform_0(%arg0: i32, %arg1: i32) -> i32 {
    %c0_i32 = arith.constant 0 : i32
    %c0_i32_0 = arith.constant 0 : i32
    return %c0_i32 : i32
  }
  func.func @transform_1(%arg0: i32, %arg1: i32) -> (i32, i32) {
    %c0_i32 = arith.constant 0 : i32
    %c0_i32_0 = arith.constant 0 : i32
    %c0_i32_1 = arith.constant 0 : i32
    return %c0_i32, %c0_i32_0 : i32, i32
  }
  func.func @transform_2(%arg0: i32, %arg1: i32) -> (i32, i32) {
    %c0_i32 = arith.constant 0 : i32
    %c0_i32_0 = arith.constant 0 : i32
    %c0_i32_1 = arith.constant 0 : i32
    return %c0_i32, %c0_i32_0 : i32, i32
  }
  func.func @transform_3(%arg0: i32, %arg1: i32) -> (i32, i32, i32, i32) {
    %c0_i32 = arith.constant 0 : i32
    %c0_i32_0 = arith.constant 0 : i32
    %c0_i32_1 = arith.constant 0 : i32
    return %arg0, %arg1, %c0_i32, %c0_i32_0 : i32, i32, i32, i32
  }
  func.func @transform_4(%arg0: i32, %arg1: i32) -> (i32, i32, i32, i32) {
    %c0_i32 = arith.constant 0 : i32
    %c0_i32_0 = arith.constant 0 : i32
    %c0_i32_1 = arith.constant 0 : i32
    return %arg0, %arg1, %c0_i32, %c0_i32_0 : i32, i32, i32, i32
  }
  func.func @transform_5(%arg0: i32, %arg1: i32) -> (i32, i32, i32, i32) {
    %c0_i32 = arith.constant 0 : i32
    %c0_i32_0 = arith.constant 0 : i32
    %c0_i32_1 = arith.constant 0 : i32
    return %arg0, %arg1, %c0_i32, %c0_i32_0 : i32, i32, i32, i32
  }
}

</mosaic_0001>

<llo_original>
// kernel: tpu_custom_call.1
$region0: #{tpu_custom_call.1}
  #allocation0 [shape = 'u32[]', space=smem, size = 0x4, offset = 0x4, fixed_abs, tag = 'smem constant byte address 0x4 - core index']
  #allocation1 [shape = 'u32[72,128]{1,0:T(1,128)}', space=vmem, size = 0x9000, scoped, tag = 'internal scratch']
  %s0 = inlined_call_operand.hbm [shape: f32[2], index: 0, kind: input, shape index: {}]
  %s1 = inlined_call_operand.hbm [shape: f32[32,32], index: 1, kind: input, shape index: {}]
  %s2 = inlined_call_operand.hbm [shape: f32[32,32], index: 2, kind: input, shape index: {}]
  %s3 = inlined_call_operand.hbm [shape: f32[2,3,32,32], index: 3, kind: input, shape index: {}]
  %s4 = inlined_call_operand.hbm [shape: f32[2,3,32,32], index: 4, kind: input, shape index: {}]
  %s5 = inlined_call_operand.vmem [shape: f32[2,3,1,1], index: 5, kind: output, shape index: {}]
  %s6 = sld [smem:[#allocation0]]
  $region73: #{tpu_custom_call.1} parent=0
    _
  %s8 = ssub.s32 1, %s6
  %s9 = scalar_select 0, %s8, %s6
  $region1: #{tpu_custom_call.1} parent=0
    #allocation2 [shape = 'u8[512]{0}', space=smem, size = 0x200, scoped, tag = 'input window, operand 0, single buffered']
    #allocation3 [shape = 's32[2]{0}', space=sflag, size = 0x8, scoped, tag = 'scoped memory for tpu_custom_call.1']
    #allocation4 [shape = 's32[2]{0}', space=sflag, size = 0x8, scoped, tag = 'scoped memory for tpu_custom_call.1']
    #allocation5 [shape = 'u8[16384]{0}', space=vmem, size = 0x4000, scoped, tag = 'input window, operand 1, single buffered']
    #allocation6 [shape = 'u8[16384]{0}', space=vmem, size = 0x4000, scoped, tag = 'input window, operand 2, single buffered']
    #allocation7 [shape = 's32[1]{0}', space=sflag, size = 0x4, scoped, tag = 'scoped memory for tpu_custom_call.1']
    #allocation8 [shape = 'u8[32768]{0}', space=vmem, size = 0x8000, scoped, tag = 'input window, operand 3']
    #allocation9 [shape = 'u8[32768]{0}', space=vmem, size = 0x8000, scoped, tag = 'input window, operand 4']
    %10 = vsyncpa [#allocation4], 0
    %11 = vsyncpa [#allocation3], 0
    %12 = vsyncpa [#allocation7], 0
    loop: start=0, step=1, limit=8
    $region2: #{tpu_custom_call.1} parent=1 // loop_pre_header
      _
    $region3: #{tpu_custom_call.1} parent=1 // loop_header
      %s14 = sphi 0, %s18
      %p15 = scmp.ge.s32.totalorder %s14, 8
      %s21 = sphi 0, %s33
      %s22 = sphi 0, %s29
      %s23 = sphi 0, %s21
      %s24 = sphi 0, %s22
      %s25 = sphi 0, %s23
      %s26 = sphi 0, %s24
      %s34 = sphi 0, %s34
      %s36 = sphi 0, %s34
      %s37 = sphi 0, %s36
      %s51 = sphi 0, %s37
      %s55 = sphi 0, %s55
      %s57 = sphi 0, %s55
      %s58 = sphi 0, %s57
      %s72 = sphi 0, %s58
      %s76 = sphi 0, %s76
      %s78 = sphi 0, %s76
      %s79 = sphi 0, %s78
      %s93 = sphi 0, %s79
      %s101 = sphi 0, %s103
      %s104 = sphi 0, %s101
      %s105 = sphi 0, %s104
      %s121 = sphi 0, %s105
      %s129 = sphi 0, %s131
      %s132 = sphi 0, %s129
      %s133 = sphi 0, %s132
      %s149 = sphi 0, %s133
      %s157 = sphi 0, %s159
      %s160 = sphi 0, %s157
      %s161 = sphi 0, %s160
      %s177 = sphi 0, %s161
    $region4: #{tpu_custom_call.1} parent=1 // loop_header_branch
      %17 = sbr.rel (%p15) target = $region8
    $region5: #{tpu_custom_call.1} parent=1 // loop_body
      %s19 = ssub.s32 %s14, 1
      %s20 = ssub.s32 %s14, 2
      %s27 = sadd.s32 1, %s22
      %p28 = scmp.ge.s32.totalorder %s27, 3
      %s29 = scalar_select %p28, 0, %s27
      %s30 = sadd.s32 1, %s21
      %s31 = scalar_select %p28, %s30, %s21
      %p32 = scmp.ge.s32.totalorder %s31, 2
      %s33 = scalar_select %p32, 0, %s31
      %s35 = sadd.s32 %s34, 1
      %p38 = scmp.eq.s32.totalorder %s14, 5
      %p39 = scmp.ne.s32.totalorder %s34, %s36
      %p40 = scmp.eq.s32.totalorder %s14, 0
      %p41 = por %p39, %p40
      %p42 = scmp.ne.s32.totalorder %s34, %s36
      %p43 = scmp.eq.s32.totalorder %s19, 5
      %p44 = por %p42, %p43
      %p45 = scmp.ne.s32.totalorder %s36, %s37
      %p46 = scmp.eq.s32.totalorder %s19, 0
      %p47 = por %p45, %p46
      %p48 = scmp.ne.s32.totalorder %s36, %s37
      %p49 = scmp.eq.s32.totalorder %s20, 5
      %p50 = por %p48, %p49
      %p52 = scmp.ne.s32.totalorder %s37, %s51
      %p53 = scmp.eq.s32.totalorder %s20, 0
      %p54 = por %p52, %p53
      %s56 = sadd.s32 %s55, 1
      %p59 = scmp.eq.s32.totalorder %s14, 5
      %p60 = scmp.ne.s32.totalorder %s55, %s57
      %p61 = scmp.eq.s32.totalorder %s14, 0
      %p62 = por %p60, %p61
      %p63 = scmp.ne.s32.totalorder %s55, %s57
      %p64 = scmp.eq.s32.totalorder %s19, 5
      %p65 = por %p63, %p64
      %p66 = scmp.ne.s32.totalorder %s57, %s58
      %p67 = scmp.eq.s32.totalorder %s19, 0
      %p68 = por %p66, %p67
      %p69 = scmp.ne.s32.totalorder %s57, %s58
      %p70 = scmp.eq.s32.totalorder %s20, 5
      %p71 = por %p69, %p70
      %p73 = scmp.ne.s32.totalorder %s58, %s72
      %p74 = scmp.eq.s32.totalorder %s20, 0
      %p75 = por %p73, %p74
      %s77 = sadd.s32 %s76, 1
      %p80 = scmp.eq.s32.totalorder %s14, 5
      %p81 = scmp.ne.s32.totalorder %s76, %s78
      %p82 = scmp.eq.s32.totalorder %s14, 0
      %p83 = por %p81, %p82
      %p84 = scmp.ne.s32.totalorder %s76, %s78
      %p85 = scmp.eq.s32.totalorder %s19, 5
      %p86 = por %p84, %p85
      %p87 = scmp.ne.s32.totalorder %s78, %s79
      %p88 = scmp.eq.s32.totalorder %s19, 0
      %p89 = por %p87, %p88
      %p90 = scmp.ne.s32.totalorder %s78, %s79
      %p91 = scmp.eq.s32.totalorder %s20, 5
      %p92 = por %p90, %p91
      %p94 = scmp.ne.s32.totalorder %s79, %s93
      %p95 = scmp.eq.s32.totalorder %s20, 0
      %p96 = por %p94, %p95
      %s97 = ssub.s32 %s21, %s33
      %s98 = ssub.s32 %s22, %s29
      %s99 = sor.u32 %s97, %s98
      %p100 = scmp.eq.s32.totalorder %s99, 0
      %s102 = sadd.s32 %s101, 1
      %s103 = scalar_select %p100, %s101, %s102
      %p106 = pneg %p100
      %p107 = scmp.eq.s32.totalorder %s14, 5
      %p108 = por %p106, %p107
      %p109 = scmp.ne.s32.totalorder %s101, %s104
      %p110 = scmp.eq.s32.totalorder %s14, 0
      %p111 = por %p109, %p110
      %p112 = scmp.ne.s32.totalorder %s101, %s104
      %p113 = scmp.eq.s32.totalorder %s19, 5
      %p114 = por %p112, %p113
      %p115 = scmp.ne.s32.totalorder %s104, %s105
      %p116 = scmp.eq.s32.totalorder %s19, 0
      %p117 = por %p115, %p116
      %p118 = scmp.ne.s32.totalorder %s104, %s105
      %p119 = scmp.eq.s32.totalorder %s20, 5
      %p120 = por %p118, %p119
      %p122 = scmp.ne.s32.totalorder %s105, %s121
      %p123 = scmp.eq.s32.totalorder %s20, 0
      %p124 = por %p122, %p123
      %s125 = ssub.s32 %s21, %s33
      %s126 = ssub.s32 %s22, %s29
      %s127 = sor.u32 %s125, %s126
      %p128 = scmp.eq.s32.totalorder %s127, 0
      %s130 = sadd.s32 %s129, 1
      %s131 = scalar_select %p128, %s129, %s130
      %p134 = pneg %p128
      %p135 = scmp.eq.s32.totalorder %s14, 5
      %p136 = por %p134, %p135
      %p137 = scmp.ne.s32.totalorder %s129, %s132
      %p138 = scmp.eq.s32.totalorder %s14, 0
      %p139 = por %p137, %p138
      %p140 = scmp.ne.s32.totalorder %s129, %s132
      %p141 = scmp.eq.s32.totalorder %s19, 5
      %p142 = por %p140, %p141
      %p143 = scmp.ne.s32.totalorder %s132, %s133
      %p144 = scmp.eq.s32.totalorder %s19, 0
      %p145 = por %p143, %p144
      %p146 = scmp.ne.s32.totalorder %s132, %s133
      %p147 = scmp.eq.s32.totalorder %s20, 5
      %p148 = por %p146, %p147
      %p150 = scmp.ne.s32.totalorder %s133, %s149
      %p151 = scmp.eq.s32.totalorder %s20, 0
      %p152 = por %p150, %p151
      %s153 = ssub.s32 %s21, %s33
      %s154 = ssub.s32 %s22, %s29
      %s155 = sor.u32 %s153, %s154
      %p156 = scmp.eq.s32.totalorder %s155, 0
      %s158 = sadd.s32 %s157, 1
      %s159 = scalar_select %p156, %s157, %s158
      %p162 = pneg %p156
      %p163 = scmp.eq.s32.totalorder %s14, 5
      %p164 = por %p162, %p163
      %p165 = scmp.ne.s32.totalorder %s157, %s160
      %p166 = scmp.eq.s32.totalorder %s14, 0
      %p167 = por %p165, %p166
      %p168 = scmp.ne.s32.totalorder %s157, %s160
      %p169 = scmp.eq.s32.totalorder %s19, 5
      %p170 = por %p168, %p169
      %p171 = scmp.ne.s32.totalorder %s160, %s161
      %p172 = scmp.eq.s32.totalorder %s19, 0
      %p173 = por %p171, %p172
      %p174 = scmp.ne.s32.totalorder %s160, %s161
      %p175 = scmp.eq.s32.totalorder %s20, 5
      %p176 = por %p174, %p175
      %p178 = scmp.ne.s32.totalorder %s161, %s177
      %p179 = scmp.eq.s32.totalorder %s20, 0
      %p180 = por %p178, %p179
      %p181 = scmp.le.s32.totalorder 1, %s14
      %p182 = scmp.lt.s32.totalorder %s14, 7
      %p183 = pnand %p181, %p182
      %p184 = pneg %p183
      // Predicated region
      $region9: #{tpu_custom_call.1} parent=5 // pred_check
        _
      $region10: #{tpu_custom_call.1} parent=5 // pred_check_branch
        %186 = sbr.rel (%p183) target = $region12
      $region11: #{tpu_custom_call.1} parent=5 // pred_region
        %s187 = ssub.s32 %s14, 1
        // Predicated region
        $region13: #{tpu_custom_call.1} parent=11 // pred_check
          %p188 = pneg %p47
        $region14: #{tpu_custom_call.1} parent=11 // pred_check_branch
          %190 = sbr.rel (%p188) target = $region16
        $region15: #{tpu_custom_call.1} parent=11 // pred_region
          %192 = vsyncadd [#allocation4], 0
          %s194 = sshll.u32 %s0, 4
          %s195 = int_to_ptr.hbm [resolvable:$true] %s194
          %197 = dma.hbm_to_smem %s195, 16, [#allocation2], [#allocation4]
        $region16: #{tpu_custom_call.1} parent=11 // pred_fallthru
          _
        // Predicated region
        $region17: #{tpu_custom_call.1} parent=11 // pred_check
          %p198 = pneg %p68
        $region18: #{tpu_custom_call.1} parent=11 // pred_check_branch
          %200 = sbr.rel (%p198) target = $region20
        $region19: #{tpu_custom_call.1} parent=11 // pred_region
          %202 = vsyncadd [#allocation3], 0
          %s203 = sshll.u32 %s1, 4
          %s204 = int_to_ptr.hbm [resolvable:$true] %s203
          %s205 = sshll.u32 [#allocation5], 4
          %s206 = int_to_ptr.vmem [resolvable:$true] %s205
          %211 = dma.hbm_to_vmem [thread:$0]  %s204, 512, %s206, [#allocation3], 128, 128, 8
        $region20: #{tpu_custom_call.1} parent=11 // pred_fallthru
          _
        // Predicated region
        $region21: #{tpu_custom_call.1} parent=11 // pred_check
          %p212 = pneg %p89
        $region22: #{tpu_custom_call.1} parent=11 // pred_check_branch
          %214 = sbr.rel (%p212) target = $region24
        $region23: #{tpu_custom_call.1} parent=11 // pred_region
          %216 = vsyncadd [#allocation7], 0
          %s217 = sshll.u32 %s2, 4
          %s218 = int_to_ptr.hbm [resolvable:$true] %s217
          %s219 = sshll.u32 [#allocation6], 4
          %s220 = int_to_ptr.vmem [resolvable:$true] %s219
          %225 = dma.hbm_to_vmem [thread:$0]  %s218, 512, %s220, [#allocation7], 128, 128, 8
        $region24: #{tpu_custom_call.1} parent=11 // pred_fallthru
          _
      $region12: #{tpu_custom_call.1} parent=5 // pred_fallthru
        _
      %p226 = scmp.lt.s32.totalorder %s14, 6
      // Predicated region
      $region25: #{tpu_custom_call.1} parent=5 // pred_check
        %p227 = pneg %p226
      $region26: #{tpu_custom_call.1} parent=5 // pred_check_branch
        %229 = sbr.rel (%p227) target = $region28
      $region27: #{tpu_custom_call.1} parent=5 // pred_region
        // Predicated region
        $region29: #{tpu_custom_call.1} parent=27 // pred_check
          %p230 = pneg %p111
        $region30: #{tpu_custom_call.1} parent=27 // pred_check_branch
          %232 = sbr.rel (%p230) target = $region32
        $region31: #{tpu_custom_call.1} parent=27 // pred_region
          %s233 = sand.u32 %s14, 1
          %s234 = scalar_lea.sflag [#allocation3], %s233
          %s235 = sand.u32 %s101, 1
          %s236 = smul.addr %s235, 32
          %s237 = scalar_lea.vmem [#allocation8], %s236
          %239 = vsyncadd %s234, 0
          %s240 = smul.addr %s22, 4
          %s241 = smul.addr %s21, 12
          %s242 = sadd.s32 %s240, %s241
          %s243 = smul.addr %s242, 8
          %s244 = scalar_lea.hbm %s3, %s243
          %s245 = sshll.u32 %s244, 4
          %s246 = int_to_ptr.hbm [resolvable:$true] %s245
          %s247 = sshll.u32 %s237, 4
          %s248 = int_to_ptr.vmem [resolvable:$true] %s247
          %253 = dma.hbm_to_vmem [thread:$0]  %s246, 512, %s248, %s234, 128, 128, 8
        $region32: #{tpu_custom_call.1} parent=27 // pred_fallthru
          _
        // Predicated region
        $region33: #{tpu_custom_call.1} parent=27 // pred_check
          %p254 = pneg %p139
        $region34: #{tpu_custom_call.1} parent=27 // pred_check_branch
          %256 = sbr.rel (%p254) target = $region36
        $region35: #{tpu_custom_call.1} parent=27 // pred_region
          %s257 = sand.u32 %s14, 1
          %s258 = scalar_lea.sflag [#allocation3], %s257
          %s259 = sand.u32 %s129, 1
          %s260 = smul.addr %s259, 32
          %s261 = scalar_lea.vmem [#allocation9], %s260
          %263 = vsyncadd %s258, 0
          %s264 = smul.addr %s22, 4
          %s265 = smul.addr %s21, 12
          %s266 = sadd.s32 %s264, %s265
          %s267 = smul.addr %s266, 8
          %s268 = scalar_lea.hbm %s4, %s267
          %s269 = sshll.u32 %s268, 4
          %s270 = int_to_ptr.hbm [resolvable:$true] %s269
          %s271 = sshll.u32 %s261, 4
          %s272 = int_to_ptr.vmem [resolvable:$true] %s271
          %277 = dma.hbm_to_vmem [thread:$0]  %s270, 512, %s272, %s258, 128, 128, 8
        $region36: #{tpu_custom_call.1} parent=27 // pred_fallthru
          _
      $region28: #{tpu_custom_call.1} parent=5 // pred_fallthru
        _
      %p278 = scmp.le.s32.totalorder 1, %s14
      %p279 = scmp.lt.s32.totalorder %s14, 7
      %p280 = pnand %p278, %p279
      %p281 = pneg %p280
      // Predicated region
      $region37: #{tpu_custom_call.1} parent=5 // pred_check
        _
      $region38: #{tpu_custom_call.1} parent=5 // pred_check_branch
        %283 = sbr.rel (%p280) target = $region40
      $region39: #{tpu_custom_call.1} parent=5 // pred_region
        %s284 = ssub.s32 %s14, 1
        // Predicated region
        $region41: #{tpu_custom_call.1} parent=39 // pred_check
          %p285 = pneg %p47
        $region42: #{tpu_custom_call.1} parent=39 // pred_check_branch
          %287 = sbr.rel (%p285) target = $region44
        $region43: #{tpu_custom_call.1} parent=39 // pred_region
          %289 = dma.done [#allocation4], 16
        $region44: #{tpu_custom_call.1} parent=39 // pred_fallthru
          _
        // Predicated region
        $region45: #{tpu_custom_call.1} parent=39 // pred_check
          %p290 = pneg %p68
        $region46: #{tpu_custom_call.1} parent=39 // pred_check_branch
          %292 = sbr.rel (%p290) target = $region48
        $region47: #{tpu_custom_call.1} parent=39 // pred_region
          %294 = dma.done [#allocation3], 512
        $region48: #{tpu_custom_call.1} parent=39 // pred_fallthru
          _
        // Predicated region
        $region49: #{tpu_custom_call.1} parent=39 // pred_check
          %p295 = pneg %p89
        $region50: #{tpu_custom_call.1} parent=39 // pred_check_branch
          %297 = sbr.rel (%p295) target = $region52
        $region51: #{tpu_custom_call.1} parent=39 // pred_region
          %299 = dma.done [#allocation7], 512
        $region52: #{tpu_custom_call.1} parent=39 // pred_fallthru
          _
        %s300 = sand.u32 %s19, 1
        %s301 = scalar_lea.sflag [#allocation3], %s300
        %s302 = sand.u32 %s104, 1
        %s303 = smul.addr %s302, 32
        %s304 = scalar_lea.vmem [#allocation8], %s303
        // Predicated region
        $region53: #{tpu_custom_call.1} parent=39 // pred_check
          %p305 = pneg %p117
        $region54: #{tpu_custom_call.1} parent=39 // pred_check_branch
          %307 = sbr.rel (%p305) target = $region56
        $region55: #{tpu_custom_call.1} parent=39 // pred_region
          %309 = dma.done %s301, 512
        $region56: #{tpu_custom_call.1} parent=39 // pred_fallthru
          _
        %s310 = sand.u32 %s19, 1
        %s311 = scalar_lea.sflag [#allocation3], %s310
        %s312 = sand.u32 %s132, 1
        %s313 = smul.addr %s312, 32
        %s314 = scalar_lea.vmem [#allocation9], %s313
        // Predicated region
        $region57: #{tpu_custom_call.1} parent=39 // pred_check
          %p315 = pneg %p145
        $region58: #{tpu_custom_call.1} parent=39 // pred_check_branch
          %317 = sbr.rel (%p315) target = $region60
        $region59: #{tpu_custom_call.1} parent=39 // pred_region
          %319 = dma.done %s311, 512
        $region60: #{tpu_custom_call.1} parent=39 // pred_fallthru
          _
        %320 = sfence
        %p321 = pneg %p47
        %p322 = pneg %p44
        %p323 = pneg %p68
        %p324 = pneg %p65
        %p325 = pneg %p89
        %p326 = pneg %p86
        %s327 = sand.u32 %s19, 1
        %s328 = scalar_lea.sflag [#allocation3], %s327
        %s329 = sand.u32 %s104, 1
        %s330 = smul.addr %s329, 32
        %s331 = scalar_lea.vmem [#allocation8], %s330
        %p332 = pneg %p117
        %p333 = pneg %p114
        %s334 = sand.u32 %s19, 1
        %s335 = scalar_lea.sflag [#allocation3], %s334
        %s336 = sand.u32 %s132, 1
        %s337 = smul.addr %s336, 32
        %s338 = scalar_lea.vmem [#allocation9], %s337
        %p339 = pneg %p145
        %p340 = pneg %p142
        %p341 = pneg %p173
        %p342 = pneg %p170
        %p343 = scmp.lt.s32.totalorder %s23, 1
        %s344 = scalar_select %p343, %s23, 1
        %p345 = scmp.lt.s32.totalorder %s24, 2
        %s346 = scalar_select %p345, %s24, 2
        %s347 = smul.addr %s344, 3
        %s348 = sadd.s32 %s346, %s347
        %s349 = scalar_lea.vmem %s5, %s348
        %p350 = scmp.lt.s32.totalorder %s23, 1
        %s351 = scalar_select %p350, %s23, 1
        %p352 = scmp.lt.s32.totalorder %s24, 2
        %s353 = scalar_select %p352, %s24, 2
        %s354 = smul.addr %s351, 3
        %s355 = sadd.s32 %s353, %s354
        %s356 = scalar_lea.vmem %s5, %s355
        %s357 = sld [smem:[#allocation2]]
        %s358 = sld [smem:[#allocation2 + $0x1]]
        %v359 = vld [vmem:[%s304] sm:$0xff]
        %v360 = vld [vmem:[%s304 + $0x8] sm:$0xff]
        %v361 = vld [vmem:[%s304 + $0x10] sm:$0xff]
        %v362 = vld [vmem:[%s304 + $0x18] sm:$0xff]
        %v363 = vld [vmem:[%s314] sm:$0xff]
        %v364 = vld [vmem:[%s314 + $0x8] sm:$0xff]
        %v365 = vld [vmem:[%s314 + $0x10] sm:$0xff]
        %v366 = vld [vmem:[%s314 + $0x18] sm:$0xff]
        %v367 = vld [vmem:[#allocation5] sm:$0xff]
        %v368 = vld [vmem:[#allocation5 + $0x8] sm:$0xff]
        %v369 = vld [vmem:[#allocation5 + $0x10] sm:$0xff]
        %v370 = vld [vmem:[#allocation5 + $0x18] sm:$0xff]
        %v371 = vld [vmem:[#allocation6] sm:$0xff]
        %v372 = vld [vmem:[#allocation6 + $0x8] sm:$0xff]
        %v373 = vld [vmem:[#allocation6 + $0x10] sm:$0xff]
        %v374 = vld [vmem:[#allocation6 + $0x18] sm:$0xff]
        %vm375 = vcmask 261120
        %v377 = vsel %vm375, %v367, 0
        %v380 = vsel %vm375, %v368, 0
        %v383 = vsel %vm375, %v369, 0
        %v386 = vsel %vm375, %v370, 0
        %388 = vmatpush.msra.mxu0 0.0
        %389 = vmatpush.msra.mxu0 0.0
        %390 = vmatpush.msra.mxu0 0.0
        %391 = vmatpush.msra.mxu0 0.0
        %392 = vmatpush.msra.mxu0 0.0
        %393 = vmatpush.msra.mxu0 0.0
        %394 = vmatpush.msra.mxu0 0.0
        %395 = vmatpush.msra.mxu0 0.0
        %396 = vmatpush.msra.mxu0 0.0
        %397 = vmatpush.msra.mxu0 0.0
        %398 = vmatpush.msra.mxu0 0.0
        %399 = vmatpush.msra.mxu0 0.0
        %400 = vmatpush.msra.mxu0 %v362
        %401 = vmatpush.msra.mxu0 %v361
        %402 = vmatpush.msra.mxu0 %v360
        %403 = vmatpush.msra.mxu0 %v359
        %404 = vmatmul.f32.gmra.mxu0 %v377
        %v405 = vpop.f32.mrf.mxu0
        %v406 = vadd.f32 0.0, %v405
        %407 = vmatmul.f32.gmra.mxu0 %v380
        %v408 = vpop.f32.mrf.mxu0
        %v409 = vadd.f32 0.0, %v408
        %410 = vmatmul.f32.gmra.mxu0 %v383
        %v411 = vpop.f32.mrf.mxu0
        %v412 = vadd.f32 0.0, %v411
        %413 = vmatmul.f32.gmra.mxu0 %v386
        %v414 = vpop.f32.mrf.mxu0
        %v415 = vadd.f32 0.0, %v414
        %416 = vdwg.mxu0
        %v418 = vsel %vm375, %v406, 0
        %v421 = vsel %vm375, %v409, 0
        %v424 = vsel %vm375, %v412, 0
        %v427 = vsel %vm375, %v415, 0
        %429 = vmatpush.msra.mxu0 0.0
        %430 = vmatpush.msra.mxu0 0.0
        %431 = vmatpush.msra.mxu0 0.0
        %432 = vmatpush.msra.mxu0 0.0
        %433 = vmatpush.msra.mxu0 0.0
        %434 = vmatpush.msra.mxu0 0.0
        %435 = vmatpush.msra.mxu0 0.0
        %436 = vmatpush.msra.mxu0 0.0
        %437 = vmatpush.msra.mxu0 0.0
        %438 = vmatpush.msra.mxu0 0.0
        %439 = vmatpush.msra.mxu0 0.0
        %440 = vmatpush.msra.mxu0 0.0
        %441 = vmatpush.msra.mxu0 %v374
        %442 = vmatpush.msra.mxu0 %v373
        %443 = vmatpush.msra.mxu0 %v372
        %444 = vmatpush.msra.mxu0 %v371
        %445 = vmatmul.f32.gmra.mxu0 %v418
        %v446 = vpop.f32.mrf.mxu0
        %v447 = vadd.f32 0.0, %v446
        %448 = vmatmul.f32.gmra.mxu0 %v421
        %v449 = vpop.f32.mrf.mxu0
        %v450 = vadd.f32 0.0, %v449
        %451 = vmatmul.f32.gmra.mxu0 %v424
        %v452 = vpop.f32.mrf.mxu0
        %v453 = vadd.f32 0.0, %v452
        %454 = vmatmul.f32.gmra.mxu0 %v427
        %v455 = vpop.f32.mrf.mxu0
        %v456 = vadd.f32 0.0, %v455
        %457 = vdwg.mxu0
        %458 = vmatpush.msra.mxu0 0.0
        %459 = vmatpush.msra.mxu0 0.0
        %460 = vmatpush.msra.mxu0 0.0
        %461 = vmatpush.msra.mxu0 0.0
        %462 = vmatpush.msra.mxu0 0.0
        %463 = vmatpush.msra.mxu0 0.0
        %464 = vmatpush.msra.mxu0 0.0
        %465 = vmatpush.msra.mxu0 0.0
        %466 = vmatpush.msra.mxu0 0.0
        %467 = vmatpush.msra.mxu0 0.0
        %468 = vmatpush.msra.mxu0 0.0
        %469 = vmatpush.msra.mxu0 0.0
        %470 = vmatpush.msra.mxu0 %v366
        %471 = vmatpush.msra.mxu0 %v365
        %472 = vmatpush.msra.mxu0 %v364
        %473 = vmatpush.msra.mxu0 %v363
        %474 = vmatmul.f32.gmra.mxu0 %v377
        %v475 = vpop.f32.mrf.mxu0
        %v476 = vadd.f32 0.0, %v475
        %477 = vmatmul.f32.gmra.mxu0 %v380
        %v478 = vpop.f32.mrf.mxu0
        %v479 = vadd.f32 0.0, %v478
        %480 = vmatmul.f32.gmra.mxu0 %v383
        %v481 = vpop.f32.mrf.mxu0
        %v482 = vadd.f32 0.0, %v481
        %483 = vmatmul.f32.gmra.mxu0 %v386
        %v484 = vpop.f32.mrf.mxu0
        %v485 = vadd.f32 0.0, %v484
        %486 = vdwg.mxu0
        %v488 = vsel %vm375, %v476, 0
        %v491 = vsel %vm375, %v479, 0
        %v494 = vsel %vm375, %v482, 0
        %v497 = vsel %vm375, %v485, 0
        %499 = vmatpush.msra.mxu0 0.0
        %500 = vmatpush.msra.mxu0 0.0
        %501 = vmatpush.msra.mxu0 0.0
        %502 = vmatpush.msra.mxu0 0.0
        %503 = vmatpush.msra.mxu0 0.0
        %504 = vmatpush.msra.mxu0 0.0
        %505 = vmatpush.msra.mxu0 0.0
        %506 = vmatpush.msra.mxu0 0.0
        %507 = vmatpush.msra.mxu0 0.0
        %508 = vmatpush.msra.mxu0 0.0
        %509 = vmatpush.msra.mxu0 0.0
        %510 = vmatpush.msra.mxu0 0.0
        %511 = vmatpush.msra.mxu0 %v374
        %512 = vmatpush.msra.mxu0 %v373
        %513 = vmatpush.msra.mxu0 %v372
        %514 = vmatpush.msra.mxu0 %v371
        %515 = vmatmul.f32.gmra.mxu0 %v488
        %v516 = vpop.f32.mrf.mxu0
        %v517 = vadd.f32 0.0, %v516
        %518 = vmatmul.f32.gmra.mxu0 %v491
        %v519 = vpop.f32.mrf.mxu0
        %v520 = vadd.f32 0.0, %v519
        %521 = vmatmul.f32.gmra.mxu0 %v494
        %v522 = vpop.f32.mrf.mxu0
        %v523 = vadd.f32 0.0, %v522
        %524 = vmatmul.f32.gmra.mxu0 %v497
        %v525 = vpop.f32.mrf.mxu0
        %v526 = vadd.f32 0.0, %v525
        %527 = vdwg.mxu0
        %v528 = vmul.f32 %v359, %v359
        %v529 = vmul.f32 %v360, %v360
        %v530 = vmul.f32 %v361, %v361
        %v531 = vmul.f32 %v362, %v362
        %532 = vmatpush.msra.mxu0 0.0
        %533 = vmatpush.msra.mxu0 0.0
        %534 = vmatpush.msra.mxu0 0.0
        %535 = vmatpush.msra.mxu0 0.0
        %536 = vmatpush.msra.mxu0 0.0
        %537 = vmatpush.msra.mxu0 0.0
        %538 = vmatpush.msra.mxu0 0.0
        %539 = vmatpush.msra.mxu0 0.0
        %540 = vmatpush.msra.mxu0 0.0
        %541 = vmatpush.msra.mxu0 0.0
        %542 = vmatpush.msra.mxu0 0.0
        %543 = vmatpush.msra.mxu0 0.0
        %544 = vmatpush.msra.mxu0 %v531
        %545 = vmatpush.msra.mxu0 %v530
        %546 = vmatpush.msra.mxu0 %v529
        %547 = vmatpush.msra.mxu0 %v528
        %548 = vmatmul.f32.gmra.mxu0 %v377
        %v549 = vpop.f32.mrf.mxu0
        %v550 = vadd.f32 0.0, %v549
        %551 = vmatmul.f32.gmra.mxu0 %v380
        %v552 = vpop.f32.mrf.mxu0
        %v553 = vadd.f32 0.0, %v552
        %554 = vmatmul.f32.gmra.mxu0 %v383
        %v555 = vpop.f32.mrf.mxu0
        %v556 = vadd.f32 0.0, %v555
        %557 = vmatmul.f32.gmra.mxu0 %v386
        %v558 = vpop.f32.mrf.mxu0
        %v559 = vadd.f32 0.0, %v558
        %560 = vdwg.mxu0
        %v562 = vsel %vm375, %v550, 0
        %v565 = vsel %vm375, %v553, 0
        %v568 = vsel %vm375, %v556, 0
        %v571 = vsel %vm375, %v559, 0
        %573 = vmatpush.msra.mxu0 0.0
        %574 = vmatpush.msra.mxu0 0.0
        %575 = vmatpush.msra.mxu0 0.0
        %576 = vmatpush.msra.mxu0 0.0
        %577 = vmatpush.msra.mxu0 0.0
        %578 = vmatpush.msra.mxu0 0.0
        %579 = vmatpush.msra.mxu0 0.0
        %580 = vmatpush.msra.mxu0 0.0
        %581 = vmatpush.msra.mxu0 0.0
        %582 = vmatpush.msra.mxu0 0.0
        %583 = vmatpush.msra.mxu0 0.0
        %584 = vmatpush.msra.mxu0 0.0
        %585 = vmatpush.msra.mxu0 %v374
        %586 = vmatpush.msra.mxu0 %v373
        %587 = vmatpush.msra.mxu0 %v372
        %588 = vmatpush.msra.mxu0 %v371
        %589 = vmatmul.f32.gmra.mxu0 %v562
        %v590 = vpop.f32.mrf.mxu0
        %v591 = vadd.f32 0.0, %v590
        %592 = vmatmul.f32.gmra.mxu0 %v565
        %v593 = vpop.f32.mrf.mxu0
        %v594 = vadd.f32 0.0, %v593
        %595 = vmatmul.f32.gmra.mxu0 %v568
        %v596 = vpop.f32.mrf.mxu0
        %v597 = vadd.f32 0.0, %v596
        %598 = vmatmul.f32.gmra.mxu0 %v571
        %v599 = vpop.f32.mrf.mxu0
        %v600 = vadd.f32 0.0, %v599
        %601 = vdwg.mxu0
        %v602 = vmul.f32 %v363, %v363
        %v603 = vmul.f32 %v364, %v364
        %v604 = vmul.f32 %v365, %v365
        %v605 = vmul.f32 %v366, %v366
        %606 = vmatpush.msra.mxu0 0.0
        %607 = vmatpush.msra.mxu0 0.0
        %608 = vmatpush.msra.mxu0 0.0
        %609 = vmatpush.msra.mxu0 0.0
        %610 = vmatpush.msra.mxu0 0.0
        %611 = vmatpush.msra.mxu0 0.0
        %612 = vmatpush.msra.mxu0 0.0
        %613 = vmatpush.msra.mxu0 0.0
        %614 = vmatpush.msra.mxu0 0.0
        %615 = vmatpush.msra.mxu0 0.0
        %616 = vmatpush.msra.mxu0 0.0
        %617 = vmatpush.msra.mxu0 0.0
        %618 = vmatpush.msra.mxu0 %v605
        %619 = vmatpush.msra.mxu0 %v604
        %620 = vmatpush.msra.mxu0 %v603
        %621 = vmatpush.msra.mxu0 %v602
        %622 = vmatmul.f32.gmra.mxu0 %v377
        %v623 = vpop.f32.mrf.mxu0
        %v624 = vadd.f32 0.0, %v623
        %625 = vmatmul.f32.gmra.mxu0 %v380
        %v626 = vpop.f32.mrf.mxu0
        %v627 = vadd.f32 0.0, %v626
        %628 = vmatmul.f32.gmra.mxu0 %v383
        %v629 = vpop.f32.mrf.mxu0
        %v630 = vadd.f32 0.0, %v629
        %631 = vmatmul.f32.gmra.mxu0 %v386
        %v632 = vpop.f32.mrf.mxu0
        %v633 = vadd.f32 0.0, %v632
        %634 = vdwg.mxu0
        %v636 = vsel %vm375, %v624, 0
        %v639 = vsel %vm375, %v627, 0
        %v642 = vsel %vm375, %v630, 0
        %v645 = vsel %vm375, %v633, 0
        %647 = vmatpush.msra.mxu0 0.0
        %648 = vmatpush.msra.mxu0 0.0
        %649 = vmatpush.msra.mxu0 0.0
        %650 = vmatpush.msra.mxu0 0.0
        %651 = vmatpush.msra.mxu0 0.0
        %652 = vmatpush.msra.mxu0 0.0
        %653 = vmatpush.msra.mxu0 0.0
        %654 = vmatpush.msra.mxu0 0.0
        %655 = vmatpush.msra.mxu0 0.0
        %656 = vmatpush.msra.mxu0 0.0
        %657 = vmatpush.msra.mxu0 0.0
        %658 = vmatpush.msra.mxu0 0.0
        %659 = vmatpush.msra.mxu0 %v374
        %660 = vmatpush.msra.mxu0 %v373
        %661 = vmatpush.msra.mxu0 %v372
        %662 = vmatpush.msra.mxu0 %v371
        %663 = vmatmul.f32.gmra.mxu0 %v636
        %v664 = vpop.f32.mrf.mxu0
        %v665 = vadd.f32 0.0, %v664
        %666 = vmatmul.f32.gmra.mxu0 %v639
        %v667 = vpop.f32.mrf.mxu0
        %v668 = vadd.f32 0.0, %v667
        %669 = vmatmul.f32.gmra.mxu0 %v642
        %v670 = vpop.f32.mrf.mxu0
        %v671 = vadd.f32 0.0, %v670
        %672 = vmatmul.f32.gmra.mxu0 %v645
        %v673 = vpop.f32.mrf.mxu0
        %v674 = vadd.f32 0.0, %v673
        %675 = vdwg.mxu0
        %v676 = vmul.f32 %v359, %v363
        %v677 = vmul.f32 %v360, %v364
        %v678 = vmul.f32 %v361, %v365
        %v679 = vmul.f32 %v362, %v366
        %680 = vmatpush.msra.mxu0 0.0
        %681 = vmatpush.msra.mxu0 0.0
        %682 = vmatpush.msra.mxu0 0.0
        %683 = vmatpush.msra.mxu0 0.0
        %684 = vmatpush.msra.mxu0 0.0
        %685 = vmatpush.msra.mxu0 0.0
        %686 = vmatpush.msra.mxu0 0.0
        %687 = vmatpush.msra.mxu0 0.0
        %688 = vmatpush.msra.mxu0 0.0
        %689 = vmatpush.msra.mxu0 0.0
        %690 = vmatpush.msra.mxu0 0.0
        %691 = vmatpush.msra.mxu0 0.0
        %692 = vmatpush.msra.mxu0 %v679
        %693 = vmatpush.msra.mxu0 %v678
        %694 = vmatpush.msra.mxu0 %v677
        %695 = vmatpush.msra.mxu0 %v676
        %696 = vmatmul.f32.gmra.mxu0 %v377
        %v697 = vpop.f32.mrf.mxu0
        %v698 = vadd.f32 0.0, %v697
        %699 = vmatmul.f32.gmra.mxu0 %v380
        %v700 = vpop.f32.mrf.mxu0
        %v701 = vadd.f32 0.0, %v700
        %702 = vmatmul.f32.gmra.mxu0 %v383
        %v703 = vpop.f32.mrf.mxu0
        %v704 = vadd.f32 0.0, %v703
        %705 = vmatmul.f32.gmra.mxu0 %v386
        %v706 = vpop.f32.mrf.mxu0
        %v707 = vadd.f32 0.0, %v706
        %708 = vdwg.mxu0
        %v710 = vsel %vm375, %v698, 0
        %v713 = vsel %vm375, %v701, 0
        %v716 = vsel %vm375, %v704, 0
        %v719 = vsel %vm375, %v707, 0
        %721 = vmatpush.msra.mxu0 0.0
        %722 = vmatpush.msra.mxu0 0.0
        %723 = vmatpush.msra.mxu0 0.0
        %724 = vmatpush.msra.mxu0 0.0
        %725 = vmatpush.msra.mxu0 0.0
        %726 = vmatpush.msra.mxu0 0.0
        %727 = vmatpush.msra.mxu0 0.0
        %728 = vmatpush.msra.mxu0 0.0
        %729 = vmatpush.msra.mxu0 0.0
        %730 = vmatpush.msra.mxu0 0.0
        %731 = vmatpush.msra.mxu0 0.0
        %732 = vmatpush.msra.mxu0 0.0
        %733 = vmatpush.msra.mxu0 %v374
        %734 = vmatpush.msra.mxu0 %v373
        %735 = vmatpush.msra.mxu0 %v372
        %736 = vmatpush.msra.mxu0 %v371
        %737 = vmatmul.f32.gmra.mxu0 %v710
        %v738 = vpop.f32.mrf.mxu0
        %v739 = vadd.f32 0.0, %v738
        %740 = vmatmul.f32.gmra.mxu0 %v713
        %v741 = vpop.f32.mrf.mxu0
        %v742 = vadd.f32 0.0, %v741
        %743 = vmatmul.f32.gmra.mxu0 %v716
        %v744 = vpop.f32.mrf.mxu0
        %v745 = vadd.f32 0.0, %v744
        %746 = vmatmul.f32.gmra.mxu0 %v719
        %v747 = vpop.f32.mrf.mxu0
        %v748 = vadd.f32 0.0, %v747
        %749 = vdwg.mxu0
        %v750 = vmul.f32 %v447, %v447
        %v751 = vmul.f32 %v450, %v450
        %v752 = vmul.f32 %v453, %v453
        %v753 = vmul.f32 %v456, %v456
        %v754 = vmul.f32 %v517, %v517
        %v755 = vmul.f32 %v520, %v520
        %v756 = vmul.f32 %v523, %v523
        %v757 = vmul.f32 %v526, %v526
        %v758 = vmul.f32 %v447, %v517
        %v759 = vmul.f32 %v450, %v520
        %v760 = vmul.f32 %v453, %v523
        %v761 = vmul.f32 %v456, %v526
        %v762 = vsub.f32 %v591, %v750
        %v763 = vsub.f32 %v594, %v751
        %v764 = vsub.f32 %v597, %v752
        %v765 = vsub.f32 %v600, %v753
        %v766 = vmax.f32 %v762, 0.0
        %v767 = vmax.f32 %v763, 0.0
        %v768 = vmax.f32 %v764, 0.0
        %v769 = vmax.f32 %v765, 0.0
        %v770 = vsub.f32 %v665, %v754
        %v771 = vsub.f32 %v668, %v755
        %v772 = vsub.f32 %v671, %v756
        %v773 = vsub.f32 %v674, %v757
        %v774 = vmax.f32 %v770, 0.0
        %v775 = vmax.f32 %v771, 0.0
        %v776 = vmax.f32 %v772, 0.0
        %v777 = vmax.f32 %v773, 0.0
        %v778 = vsub.f32 %v739, %v758
        %v779 = vsub.f32 %v742, %v759
        %v780 = vsub.f32 %v745, %v760
        %v781 = vsub.f32 %v748, %v761
        %v782 = vmul.f32 %v758, 2.0
        %v783 = vmul.f32 %v759, 2.0
        %v784 = vmul.f32 %v760, 2.0
        %v785 = vmul.f32 %v761, 2.0
        %v786 = vstv %s357
        %v787 = vadd.f32 %v782, %v786
        %v788 = vadd.f32 %v783, %v786
        %v789 = vadd.f32 %v784, %v786
        %v790 = vadd.f32 %v785, %v786
        %v791 = vmul.f32 %v778, 2.0
        %v792 = vmul.f32 %v779, 2.0
        %v793 = vmul.f32 %v780, 2.0
        %v794 = vmul.f32 %v781, 2.0
        %v795 = vstv %s358
        %v796 = vadd.f32 %v791, %v795
        %v797 = vadd.f32 %v792, %v795
        %v798 = vadd.f32 %v793, %v795
        %v799 = vadd.f32 %v794, %v795
        %v800 = vmul.f32 %v787, %v796
        %v801 = vmul.f32 %v788, %v797
        %v802 = vmul.f32 %v789, %v798
        %v803 = vmul.f32 %v790, %v799
        %v804 = vadd.f32 %v750, %v754
        %v805 = vadd.f32 %v751, %v755
        %v806 = vadd.f32 %v752, %v756
        %v807 = vadd.f32 %v753, %v757
        %v808 = vadd.f32 %v804, %v786
        %v809 = vadd.f32 %v805, %v786
        %v810 = vadd.f32 %v806, %v786
        %v811 = vadd.f32 %v807, %v786
        %v812 = vadd.f32 %v766, %v774
        %v813 = vadd.f32 %v767, %v775
        %v814 = vadd.f32 %v768, %v776
        %v815 = vadd.f32 %v769, %v777
        %v816 = vadd.f32 %v812, %v795
        %v817 = vadd.f32 %v813, %v795
        %v818 = vadd.f32 %v814, %v795
        %v819 = vadd.f32 %v815, %v795
        %v820 = vmul.f32 %v808, %v816
        %v821 = vmul.f32 %v809, %v817
        %v822 = vmul.f32 %v810, %v818
        %v823 = vmul.f32 %v811, %v819
        %v824 = vrcp.pop %v820
        %v825 = vmul.f32 %v820, %v824
        %v826 = vsub.f32 1.0, %v825
        %v827 = vmul.f32 %v824, %v826
        %v828 = vadd.f32 %v824, %v827
        %vm829 = vweird.f32 %v820
        %vm830 = vweird.f32 %v824
        %vm831 = vmor %vm829, %vm830
        %v832 = vsel %vm831, %v824, %v828
        %v833 = vand.u32 2147483647, %v820
        %vm834 = vcmp.eq.f32.partialorder %v833, 8.507059e+37
        %v835 = vand.u32 %v820, 2147483648
        %v836 = vor.u32 1.1754944e-38, %v835
        %v837 = vsel %vm834, %v836, %v832
        %v838 = vmul.f32 %v800, %v837
        %v839 = vrcp.pop %v821
        %v840 = vmul.f32 %v821, %v839
        %v841 = vsub.f32 1.0, %v840
        %v842 = vmul.f32 %v839, %v841
        %v843 = vadd.f32 %v839, %v842
        %vm844 = vweird.f32 %v821
        %vm845 = vweird.f32 %v839
        %vm846 = vmor %vm844, %vm845
        %v847 = vsel %vm846, %v839, %v843
        %v848 = vand.u32 2147483647, %v821
        %vm849 = vcmp.eq.f32.partialorder %v848, 8.507059e+37
        %v850 = vand.u32 %v821, 2147483648
        %v851 = vor.u32 1.1754944e-38, %v850
        %v852 = vsel %vm849, %v851, %v847
        %v853 = vmul.f32 %v801, %v852
        %v854 = vrcp.pop %v822
        %v855 = vmul.f32 %v822, %v854
        %v856 = vsub.f32 1.0, %v855
        %v857 = vmul.f32 %v854, %v856
        %v858 = vadd.f32 %v854, %v857
        %vm859 = vweird.f32 %v822
        %vm860 = vweird.f32 %v854
        %vm861 = vmor %vm859, %vm860
        %v862 = vsel %vm861, %v854, %v858
        %v863 = vand.u32 2147483647, %v822
        %vm864 = vcmp.eq.f32.partialorder %v863, 8.507059e+37
        %v865 = vand.u32 %v822, 2147483648
        %v866 = vor.u32 1.1754944e-38, %v865
        %v867 = vsel %vm864, %v866, %v862
        %v868 = vmul.f32 %v802, %v867
        %v869 = vrcp.pop %v823
        %v870 = vmul.f32 %v823, %v869
        %v871 = vsub.f32 1.0, %v870
        %v872 = vmul.f32 %v869, %v871
        %v873 = vadd.f32 %v869, %v872
        %vm874 = vweird.f32 %v823
        %vm875 = vweird.f32 %v869
        %vm876 = vmor %vm874, %vm875
        %v877 = vsel %vm876, %v869, %v873
        %v878 = vand.u32 2147483647, %v823
        %vm879 = vcmp.eq.f32.partialorder %v878, 8.507059e+37
        %v880 = vand.u32 %v823, 2147483648
        %v881 = vor.u32 1.1754944e-38, %v880
        %v882 = vsel %vm879, %v881, %v877
        %v883 = vmul.f32 %v803, %v882
        %v884 = vsel %vm375, %v838, 0.0
        %v885 = vsel %vm375, %v853, 0.0
        %v886 = vadd.f32 %v884, %v885
        %v887 = vsel %vm375, %v868, 0.0
        %v888 = vadd.f32 %v886, %v887
        %v889 = vsel %vm375, %v883, 0.0
        %v890 = vadd.f32 %v888, %v889
        %891 = vadd.xlane.f32.xlu0 %v890
        %v892 = vpop.xlane.xlu0 %891
        %v893 = vrot.slane %v892, 4
        %v894 = vadd.f32 %v892, %v893
        %v895 = vrot.slane %v894, 2
        %v896 = vadd.f32 %v894, %v895
        %v897 = vrot.slane %v896, 1
        %v898 = vadd.f32 %v896, %v897
        %s899 = vtos %v898
        %v900 = vstv %s899
        %vm901 = vcmask 0
        %902 = vst.msk [vmem:[%s356] sm:$0x1] %vm901, %v900
        %p903 = scmp.lt.s32.totalorder %s23, 1
        %s904 = scalar_select %p903, %s23, 1
        %p905 = scmp.lt.s32.totalorder %s24, 2
        %s906 = scalar_select %p905, %s24, 2
        %s907 = smul.addr %s904, 3
        %s908 = sadd.s32 %s906, %s907
        %s909 = scalar_lea.vmem %s5, %s908
        // Predicated region
        $region61: #{tpu_custom_call.1} parent=39 // pred_check
          %p910 = pneg %p170
        $region62: #{tpu_custom_call.1} parent=39 // pred_check_branch
          %912 = sbr.rel (%p910) target = $region64
        $region63: #{tpu_custom_call.1} parent=39 // pred_region
          _
        $region64: #{tpu_custom_call.1} parent=39 // pred_fallthru
          _
      $region40: #{tpu_custom_call.1} parent=5 // pred_fallthru
        _
      %p913 = scmp.le.s32.totalorder 2, %s14
      // Predicated region
      $region65: #{tpu_custom_call.1} parent=5 // pred_check
        %p914 = pneg %p913
      $region66: #{tpu_custom_call.1} parent=5 // pred_check_branch
        %916 = sbr.rel (%p914) target = $region68
      $region67: #{tpu_custom_call.1} parent=5 // pred_region
        %s917 = ssub.s32 %s14, 2
        // Predicated region
        $region69: #{tpu_custom_call.1} parent=67 // pred_check
          %p918 = pneg %p176
        $region70: #{tpu_custom_call.1} parent=67 // pred_check_branch
          %920 = sbr.rel (%p918) target = $region72
        $region71: #{tpu_custom_call.1} parent=67 // pred_region
          %p921 = scmp.lt.s32.totalorder %s25, 1
          %s922 = scalar_select %p921, %s25, 1
          %p923 = scmp.lt.s32.totalorder %s26, 2
          %s924 = scalar_select %p923, %s26, 2
          %s925 = smul.addr %s922, 3
          %s926 = sadd.s32 %s924, %s925
          %s927 = scalar_lea.vmem %s5, %s926
        $region72: #{tpu_custom_call.1} parent=67 // pred_fallthru
          _
      $region68: #{tpu_custom_call.1} parent=5 // pred_fallthru
        _
    $region6: #{tpu_custom_call.1} parent=1 // loop_footer
      %s18 = sadd.s32 1, %s14
    $region7: #{tpu_custom_call.1} parent=1 // loop_footer_branch
      %13 = sbr.rel target = $region3
    $region8: #{tpu_custom_call.1} parent=1 // loop_exit
      _
    %928 = vsyncpa [#allocation3], 1
    %s929 = scalar_lea.sflag [#allocation3], 1
    %930 = vsyncpa %s929, 1
    %931 = vsyncpa [#allocation7], 1
    %932 = vsyncpa [#allocation4], 1
    %s933 = scalar_lea.sflag [#allocation4], 1
    %934 = vsyncpa %s933, 1

</llo_original>
